<compile_context>
chip_gen: v7x
topology: tpu7x:2x2x1
jax: 0.10.0
libtpu: 0.0.40
codegen_flags: <defaults>
</compile_context>

<pallas_src>
import jax
import jax.numpy as jnp
from jax.experimental import pallas as pl
from jax.experimental.pallas import tpu as pltpu


def _reward_surrogate_kernel(x_ref, w_ref, b_ref, out_ref):
    # Per grid step:
    #   x_ref  : (TB, 2N)  batch tile; lanes hold the flattened (node, coord) axis
    #   w_ref  : (1, 2N)   folded per-lane weights (already include the 1/N mean)
    #   b_ref  : (1,)      folded scalar bias (SMEM)
    #   out_ref: (TB, 1)
    x = x_ref[...]
    w = w_ref[...]
    # VPU multiply with a sublane-broadcast weight row, XLU lane reduce.
    acc = jnp.sum(x * w, axis=1, keepdims=True)            # (TB, 1) f32
    out_ref[...] = (acc + b_ref[0]).astype(out_ref.dtype)


def reward_surrogate_forward(node_features, params, *, batch_tile=1024):
    """node_features: (B, N, 2) float32 -> (B, 1) float32."""
    B, N, C = node_features.shape
    assert C == 2
    w0, b0, w1, b1, w3, b3 = params   # torch layouts: (out,in) weights, (out,) biases

    # ---- weight-only affine fold (tiny, once per call; inputs untouched) ----
    w_eff = w3 @ w1 @ w0                                    # (1, 2)
    b_eff = (w3 @ (w1 @ b0 + b1) + b3).reshape((1,))        # (1,)
    # Per-lane weight row for the flattened (node, coord) axis; folds in the
    # 1/N of the node mean.  Lane 2n -> x coord of node n, lane 2n+1 -> y.
    w_row = (jnp.tile(w_eff, (1, N)) / N).astype(jnp.float32)   # (1, 2N)
    b_eff = b_eff.astype(jnp.float32)

    # Free relayout: merge the contiguous trailing (N, 2) dims.
    x = node_features.reshape(B, 2 * N).astype(jnp.float32)

    # ---- batch tiling ----
    tb = min(batch_tile, B)
    if tb != B:
        tb = max(8, (tb // 8) * 8)          # sublane-aligned tiles
    num_tiles = pl.cdiv(B, tb)
    if num_tiles < 2 and B > 8:
        # keep >= 2 grid steps so both of v7x's TensorCores get work
        tb = ((pl.cdiv(B, 2) + 7) // 8) * 8
        num_tiles = pl.cdiv(B, tb)

    out = pl.pallas_call(
        _reward_surrogate_kernel,
        out_shape=jax.ShapeDtypeStruct((B, 1), jnp.float32),
        grid_spec=pltpu.PrefetchScalarGridSpec(
            num_scalar_prefetch=0,
            grid=(num_tiles,),
            in_specs=[
                pl.BlockSpec((tb, 2 * N), lambda t: (t, 0)),         # input tile
                pl.BlockSpec((1, 2 * N), lambda t: (0, 0)),          # folded weights
                pl.BlockSpec(memory_space=pltpu.MemorySpace.SMEM),   # folded bias
            ],
            out_specs=pl.BlockSpec((tb, 1), lambda t: (t, 0)),
        ),
        compiler_params=pltpu.CompilerParams(
            dimension_semantics=("parallel",)),
    )(x, w_row, b_eff)
    return out                                               # (B, 1)


def init_params(key, hidden_dim=64):
    """nn.Linear-style U(-1/sqrt(fan_in), 1/sqrt(fan_in)) init, torch layouts."""
    ks = jax.random.split(key, 6)

    def lin(kw, kb, fan_in, fan_out):
        bound = 1.0 / (fan_in ** 0.5)
        w = jax.random.uniform(kw, (fan_out, fan_in), jnp.float32, -bound, bound)
        b = jax.random.uniform(kb, (fan_out,), jnp.float32, -bound, bound)
        return w, b

    w0, b0 = lin(ks[0], ks[1], 2, hidden_dim)             # node_embed
    w1, b1 = lin(ks[2], ks[3], hidden_dim, hidden_dim)    # linear1
    w3, b3 = lin(ks[4], ks[5], hidden_dim, 1)             # linear3
    # TODO(synk): edge_embed/linear2/U/V/A/B/C exist in the module but are
    # unused by forward(), so they are not materialized here.
    return (w0, b0, w1, b1, w3, b3)


def reference_forward(node_features, params):
    """Unfolded reference matching the PyTorch op order."""
    w0, b0, w1, b1, w3, b3 = params
    h = node_features @ w0.T + b0       # (B, N, H)
    h = h @ w1.T + b1                   # (B, N, H)
    h = h @ w3.T + b3                   # (B, N, 1)
    return jnp.mean(h, axis=1)          # (B, 1)


if __name__ == "__main__":
    key = jax.random.PRNGKey(0)
    k_p, k1, k2, k3 = jax.random.split(key, 4)

    N, H = 8, 64
    params = init_params(k_p, hidden_dim=H)

    # (batch, explicit batch_tile or None for default)
    cases = [
        (2, None),    # primary small case (single tile, tb == B)
        (37, None),   # v7x split path: tb=24, 2-step grid, ragged last tile
        (40, 16),     # user-specified tile: 3-step grid, ragged last tile
    ]
    keys = [k1, k2, k3]
    for (B, bt), kx in zip(cases, keys):
        node_features = jax.random.normal(kx, (B, N, 2), jnp.float32)
        if bt is None:
            out = reward_surrogate_forward(node_features, params)
        else:
            out = reward_surrogate_forward(node_features, params, batch_tile=bt)
        out = jax.block_until_ready(out)
        ref = reference_forward(node_features, params)
        assert out.shape == (B, 1), (out.shape, B)
        assert jnp.allclose(out, ref, atol=1e-5, rtol=1e-4), (B, out, ref)

    print("KERNEL_OK")
</pallas_src>

<mosaic_0001>
module attributes {stable_mosaic.version = 11 : i64} {
  func.func @_reward_surrogate_kernel(%arg0: i32, %arg1: memref<2x16xf32, #tpu.memory_space<vmem>>, %arg2: memref<1x16xf32, #tpu.memory_space<vmem>>, %arg3: memref<1xf32, #tpu.memory_space<smem>>, %arg4: memref<2x1xf32, #tpu.memory_space<vmem>>) attributes {dimension_semantics = [#tpu.dimension_semantics<parallel>], iteration_bounds = array<i64: 1>, scalar_prefetch = 0 : i64, scratch_operands = 0 : i64, tpu.core_type = #tpu.core_type<tc>, window_params = [{transform_indices = @transform_0, window_bounds = array<i64: 2, 16>}, {pipeline_mode = #tpu.pipeline_mode<synchronous>, transform_indices = @transform_1, window_bounds = array<i64: 1, 16>}, {transform_indices = @transform_2, window_bounds = array<i64: 1>}, {transform_indices = @transform_3, window_bounds = array<i64: 2, 1>}]} {
    %c0 = arith.constant 0 : index
    %c0_0 = arith.constant 0 : index
    %0 = vector.load %arg1[%c0, %c0_0] : memref<2x16xf32, #tpu.memory_space<vmem>>, vector<2x16xf32>
    %c0_1 = arith.constant 0 : index
    %c0_2 = arith.constant 0 : index
    %1 = vector.load %arg2[%c0_1, %c0_2] : memref<1x16xf32, #tpu.memory_space<vmem>>, vector<1x16xf32>
    %2 = vector.broadcast %1 : vector<1x16xf32> to vector<2x16xf32>
    %3 = arith.mulf %0, %2 : vector<2x16xf32>
    %cst = arith.constant dense<0.000000e+00> : vector<2xf32>
    %4 = vector.multi_reduction <add>, %3, %cst [1] : vector<2x16xf32> to vector<2xf32>
    %5 = vector.shape_cast %4 : vector<2xf32> to vector<2x1xf32>
    %c0_3 = arith.constant 0 : index
    %6 = memref.load %arg3[%c0_3] : memref<1xf32, #tpu.memory_space<smem>>
    %7 = vector.broadcast %6 : f32 to vector<2x1xf32>
    %8 = arith.addf %5, %7 : vector<2x1xf32>
    %c0_4 = arith.constant 0 : index
    %c0_5 = arith.constant 0 : index
    %9 = vector.load %arg4[%c0_4, %c0_5] : memref<2x1xf32, #tpu.memory_space<vmem>>, vector<2x1xf32>
    tpu.vector_store %arg4[%c0_4, %c0_5], %8 {strides = array<i32>} : memref<2x1xf32, #tpu.memory_space<vmem>>, vector<2x1xf32>,
    return
  }
  func.func @transform_0(%arg0: i32) -> (i32, i32) {
    %c0_i32 = arith.constant 0 : i32
    %c0_i32_0 = arith.constant 0 : i32
    return %arg0, %c0_i32 : i32, i32
  }
  func.func @transform_1(%arg0: i32) -> (i32, i32) {
    %c0_i32 = arith.constant 0 : i32
    %c0_i32_0 = arith.constant 0 : i32
    %c0_i32_1 = arith.constant 0 : i32
    return %c0_i32, %c0_i32_0 : i32, i32
  }
  func.func @transform_2(%arg0: i32) -> i32 {
    %c0_i32 = arith.constant 0 : i32
    %c0_i32_0 = arith.constant 0 : i32
    return %c0_i32 : i32
  }
  func.func @transform_3(%arg0: i32) -> (i32, i32) {
    %c0_i32 = arith.constant 0 : i32
    %c0_i32_0 = arith.constant 0 : i32
    return %arg0, %c0_i32 : i32, i32
  }
}

</mosaic_0001>

<llo_original>
// kernel: tpu_custom_call.1
$region0: #{tpu_custom_call.1}
  #allocation0 [shape = 'u32[]', space=smem, size = 0x4, offset = 0x4, fixed_abs, tag = 'smem constant byte address 0x4 - core index']
  #allocation1 [shape = 'u32[144,128]{1,0:T(1,128)}', space=vmem, size = 0x12000, scoped, tag = 'internal scratch']
  #allocation2 [shape = 'f32[1]{0:T(128)S(6)}', space=smem, size = 0x200, scoped, tag = 'scoped memory for tpu_custom_call.1']
  %s0 = inlined_call_operand.vmem [shape: f32[2,16], index: 0, kind: input, shape index: {}]
  %s1 = inlined_call_operand.vmem [shape: f32[1,16], index: 1, kind: input, shape index: {}]
  %s2 = inlined_call_operand.<no memory space> [shape: f32[1], index: 2, kind: input, shape index: {}]
  %s3 = inlined_call_operand.vmem [shape: f32[2,1], index: 3, kind: output, shape index: {}]
  %s4 = sld [smem:[#allocation0]]
  $region22: #{tpu_custom_call.1} parent=0
    _
  %s6 = ssub.s32 1, %s4
  %s7 = scalar_select 0, %s6, %s4
  %8 = sst [smem:[#allocation2]] %s2
  // Predicated region
  $region2: #{tpu_custom_call.1} parent=0 // pred_check
    _
  $region3: #{tpu_custom_call.1} parent=0 // pred_check_branch
    %10 = sbr.rel (0) target = $region5
  $region4: #{tpu_custom_call.1} parent=0 // pred_region
    _
  $region5: #{tpu_custom_call.1} parent=0 // pred_fallthru
    _
  // Predicated region
  $region6: #{tpu_custom_call.1} parent=0 // pred_check
    _
  $region7: #{tpu_custom_call.1} parent=0 // pred_check_branch
    %12 = sbr.rel (0) target = $region9
  $region8: #{tpu_custom_call.1} parent=0 // pred_region
    _
  $region9: #{tpu_custom_call.1} parent=0 // pred_fallthru
    _
  // Predicated region
  $region10: #{tpu_custom_call.1} parent=0 // pred_check
    _
  $region11: #{tpu_custom_call.1} parent=0 // pred_check_branch
    %14 = sbr.rel (0) target = $region13
  $region12: #{tpu_custom_call.1} parent=0 // pred_region
    _
  $region13: #{tpu_custom_call.1} parent=0 // pred_fallthru
    _
  %v15 = vld [vmem:[%s0] sm:$0x3]
  %v16 = vld [vmem:[%s1] sm:$0x1]
  %v18 = vlaneseq
  %v19 = vshrl.u32 %v18, 7
  %v20 = vsub.s32 0, %v19
  %v21 = vrot.slane %v16, %v20
  %v23 = vmul.f32 %v15, %v21
  %vm24 = vcmask 123904
  %v25 = vsel %vm24, %v23, 0.0
  %26 = vadd.xlane.f32.xlu0 %v25
  %v27 = vpop.xlane.xlu0 %26
  %s28 = sld [smem:[#allocation2]]
  %v29 = vstv %s28
  %v30 = vadd.f32 %v27, %v29
  %vm31 = vcmask 1024
  %32 = vst.msk [vmem:[%s3] sm:$0x3] %vm31, %v30
  // Predicated region
  $region14: #{tpu_custom_call.1} parent=0 // pred_check
    _
  $region15: #{tpu_custom_call.1} parent=0 // pred_check_branch
    %34 = sbr.rel (0) target = $region17
  $region16: #{tpu_custom_call.1} parent=0 // pred_region
    _
  $region17: #{tpu_custom_call.1} parent=0 // pred_fallthru
    _
  // Predicated region
  $region18: #{tpu_custom_call.1} parent=0 // pred_check
    _
  $region19: #{tpu_custom_call.1} parent=0 // pred_check_branch
    %36 = sbr.rel (0) target = $region21
  $region20: #{tpu_custom_call.1} parent=0 // pred_region
    _
  $region21: #{tpu_custom_call.1} parent=0 // pred_fallthru
    _

</llo_original>
